<compile_context>
chip_gen: v7x
topology: tpu7x:2x2x1
jax: 0.10.0
libtpu: 0.0.40
codegen_flags: <defaults>
</compile_context>

<pallas_src>
import jax
import jax.numpy as jnp
from jax.experimental import pallas as pl
from jax.experimental.pallas import tpu as pltpu


def estbn_kernel(x_ref, scale_ref, shift_ref, o_ref):
    # x:      (TILE_R, TILE_M)
    # scale:  (TILE_R, 1)  f32
    # shift:  (TILE_R, 1)  f32
    x = x_ref[...].astype(jnp.float32)
    o_ref[...] = (x * scale_ref[...] + shift_ref[...]).astype(o_ref.dtype)


def estbn_forward(x, running_mean, running_var, weight, bias,
                  *, max_rows=128, target_block_bytes=2 * 1024 * 1024):
    """x: (N, C, *spatial) float; params: (C,) each. Returns same shape/dtype as x."""
    N, C = int(x.shape[0]), int(x.shape[1])
    M = 1
    for s in x.shape[2:]:
        M *= int(s)
    R = N * C
    itemsize = jnp.dtype(x.dtype).itemsize

    # Fold BN into per-channel scale/shift (f32, O(C) work in the wrapper),
    # then expand to per-row (row = n*C + c  ->  channel = row % C).
    inv_std = jax.lax.rsqrt(running_var.astype(jnp.float32) + 1e-5)
    scale_c = weight.astype(jnp.float32) * inv_std
    shift_c = bias.astype(jnp.float32) - running_mean.astype(jnp.float32) * scale_c
    scale = jnp.tile(scale_c, N).reshape(R, 1)
    shift = jnp.tile(shift_c, N).reshape(R, 1)

    # Zero-cost reshape: NCDHW is already contiguous as (N*C, D*H*W).
    x2 = x.reshape(R, M)

    # --- Tile selection -----------------------------------------------------
    # Rows: full extent when small, else 128 (multiple of 8/16/32 sublane
    # packing for f32/bf16/int8).
    tile_r = R if R <= max_rows else max_rows

    # Lanes: dtype-aware so a block is ~target_block_bytes regardless of dtype
    # (f32 -> 4096 lanes at tile_r=128, bf16 -> 8192, int8 -> 16384).
    lanes_budget = max(128, target_block_bytes // max(1, tile_r * itemsize))
    lanes_budget = (lanes_budget // 128) * 128
    tile_m = M if M <= lanes_budget else lanes_budget

    # Grid: j (lane/M) axis innermost so the (tile_r,1) param blocks are not
    # re-fetched across the inner loop.  Both axes are "parallel" (no reduction)
    # so v7x's two TensorCores can split the grid.
    grid = (pl.cdiv(R, tile_r), pl.cdiv(M, tile_m))

    # --- Explicit VMEM budget (double-buffered in + out + params + slack) ----
    sub_mult = max(8, 32 // itemsize)                       # 8 f32 / 16 bf16 / 32 int8
    padded_r = ((tile_r + sub_mult - 1) // sub_mult) * sub_mult
    padded_m = ((tile_m + 127) // 128) * 128
    block_bytes = padded_r * padded_m * itemsize
    param_block_bytes = padded_r * 128 * 4                  # (tile_r,1) f32 pads to 128 lanes
    vmem_limit_bytes = int(
        4 * block_bytes                                     # 2 x-bufs + 2 out-bufs
        + 4 * param_block_bytes                             # 2 bufs each for scale/shift
        + 2 * 1024 * 1024                                   # slack for internal scratch
    )

    cost = pl.CostEstimate(
        flops=2 * R * M,                                    # one FMA per element
        transcendentals=0,
        bytes_accessed=2 * R * M * itemsize + 2 * R * 4,
    )

    out2 = pl.pallas_call(
        estbn_kernel,
        out_shape=jax.ShapeDtypeStruct((R, M), x.dtype),
        grid=grid,
        in_specs=[
            pl.BlockSpec((tile_r, tile_m), lambda i, j: (i, j)),
            pl.BlockSpec((tile_r, 1), lambda i, j: (i, 0)),
            pl.BlockSpec((tile_r, 1), lambda i, j: (i, 0)),
        ],
        out_specs=pl.BlockSpec((tile_r, tile_m), lambda i, j: (i, j)),
        compiler_params=pltpu.CompilerParams(
            dimension_semantics=("parallel", "parallel"),
            vmem_limit_bytes=vmem_limit_bytes,
        ),
        cost_estimate=cost,
    )(x2, scale, shift)

    return out2.reshape(x.shape)


# TODO(synk): training-mode running-stat buffer updates are not implemented;
# with the module's default estbn_moving_speed == 0 they are a no-op anyway.


if __name__ == "__main__":
    key = jax.random.PRNGKey(0)
    k_x, k_m, k_v, k_w, k_b = jax.random.split(key, 5)

    N, C, D, H, W = 2, 4, 4, 8, 8          # small 5-D NCDHW input
    x = jax.random.normal(k_x, (N, C, D, H, W), dtype=jnp.float32)

    # Deterministic parameters (module init: w=1, b=0, mean=0, var=1), perturbed
    # deterministically so the math is actually exercised.
    weight = jnp.ones((C,), jnp.float32) + 0.1 * jax.random.normal(k_w, (C,))
    bias = jnp.zeros((C,), jnp.float32) + 0.1 * jax.random.normal(k_b, (C,))
    running_mean = jnp.zeros((C,), jnp.float32) + 0.1 * jax.random.normal(k_m, (C,))
    running_var = jnp.ones((C,), jnp.float32) + 0.1 * jnp.abs(jax.random.normal(k_v, (C,)))

    out = estbn_forward(x, running_mean, running_var, weight, bias)
    out = jax.block_until_ready(out)

    # Pure-JAX reference matching the PyTorch broadcast semantics.
    bc = lambda p: p.reshape(1, C, 1, 1, 1)
    ref = bc(weight) * (x - bc(running_mean)) / jnp.sqrt(bc(running_var) + 1e-5) + bc(bias)

    assert out.shape == x.shape and out.dtype == x.dtype
    assert jnp.allclose(out, ref, atol=1e-5, rtol=1e-5)
    print("KERNEL_OK")
</pallas_src>

<mosaic_0001>
module attributes {stable_mosaic.version = 11 : i64} {
  func.func @estbn_kernel(%arg0: i32, %arg1: i32, %arg2: memref<8x256xf32, #tpu.memory_space<vmem>>, %arg3: memref<8x1xf32, #tpu.memory_space<vmem>>, %arg4: memref<8x1xf32, #tpu.memory_space<vmem>>, %arg5: memref<8x256xf32, #tpu.memory_space<vmem>>) attributes {dimension_semantics = [#tpu.dimension_semantics<parallel>, #tpu.dimension_semantics<parallel>], iteration_bounds = array<i64: 1, 1>, scalar_prefetch = 0 : i64, scratch_operands = 0 : i64, tpu.core_type = #tpu.core_type<tc>, window_params = [{transform_indices = @transform_0, window_bounds = array<i64: 8, 256>}, {transform_indices = @transform_1, window_bounds = array<i64: 8, 1>}, {transform_indices = @transform_2, window_bounds = array<i64: 8, 1>}, {transform_indices = @transform_3, window_bounds = array<i64: 8, 256>}]} {
    %c0 = arith.constant 0 : index
    %c0_0 = arith.constant 0 : index
    %0 = vector.load %arg2[%c0, %c0_0] : memref<8x256xf32, #tpu.memory_space<vmem>>, vector<8x256xf32>
    %c0_1 = arith.constant 0 : index
    %c0_2 = arith.constant 0 : index
    %1 = vector.load %arg3[%c0_1, %c0_2] : memref<8x1xf32, #tpu.memory_space<vmem>>, vector<8x1xf32>
    %2 = vector.broadcast %1 : vector<8x1xf32> to vector<8x256xf32>
    %3 = arith.mulf %0, %2 : vector<8x256xf32>
    %c0_3 = arith.constant 0 : index
    %c0_4 = arith.constant 0 : index
    %4 = vector.load %arg4[%c0_3, %c0_4] : memref<8x1xf32, #tpu.memory_space<vmem>>, vector<8x1xf32>
    %5 = vector.broadcast %4 : vector<8x1xf32> to vector<8x256xf32>
    %6 = arith.addf %3, %5 : vector<8x256xf32>
    %c0_5 = arith.constant 0 : index
    %c0_6 = arith.constant 0 : index
    %7 = vector.load %arg5[%c0_5, %c0_6] : memref<8x256xf32, #tpu.memory_space<vmem>>, vector<8x256xf32>
    tpu.vector_store %arg5[%c0_5, %c0_6], %6 {strides = array<i32>} : memref<8x256xf32, #tpu.memory_space<vmem>>, vector<8x256xf32>,
    return
  }
  func.func @transform_0(%arg0: i32, %arg1: i32) -> (i32, i32) {
    %c0_i32 = arith.constant 0 : i32
    return %arg0, %arg1 : i32, i32
  }
  func.func @transform_1(%arg0: i32, %arg1: i32) -> (i32, i32) {
    %c0_i32 = arith.constant 0 : i32
    %c0_i32_0 = arith.constant 0 : i32
    return %arg0, %c0_i32 : i32, i32
  }
  func.func @transform_2(%arg0: i32, %arg1: i32) -> (i32, i32) {
    %c0_i32 = arith.constant 0 : i32
    %c0_i32_0 = arith.constant 0 : i32
    return %arg0, %c0_i32 : i32, i32
  }
  func.func @transform_3(%arg0: i32, %arg1: i32) -> (i32, i32) {
    %c0_i32 = arith.constant 0 : i32
    return %arg0, %arg1 : i32, i32
  }
}

</mosaic_0001>

<llo_original>
// kernel: tpu_custom_call.1
$region0: #{tpu_custom_call.1}
  #allocation0 [shape = 'u32[]', space=smem, size = 0x4, offset = 0x4, fixed_abs, tag = 'smem constant byte address 0x4 - core index']
  #allocation1 [shape = 'u32[144,128]{1,0:T(1,128)}', space=vmem, size = 0x12000, scoped, tag = 'internal scratch']
  %s0 = inlined_call_operand.vmem [shape: f32[8,256], index: 0, kind: input, shape index: {}]
  %s1 = inlined_call_operand.vmem [shape: f32[8,1], index: 1, kind: input, shape index: {}]
  %s2 = inlined_call_operand.vmem [shape: f32[8,1], index: 2, kind: input, shape index: {}]
  %s3 = inlined_call_operand.hbm [shape: f32[8,256], index: 3, kind: output, shape index: {}]
  %s4 = sld [smem:[#allocation0]]
  $region22: #{tpu_custom_call.1} parent=0
    _
  %s6 = ssub.s32 1, %s4
  %s7 = scalar_select 0, %s6, %s4
  $region1: #{tpu_custom_call.1} parent=0
    #allocation2 [shape = 'u8[8192]{0}', space=vmem, size = 0x2000, scoped, tag = 'output window, operand 0, single buffered']
    #allocation3 [shape = 's32[1]{0}', space=sflag, size = 0x4, scoped, tag = 'scoped memory for tpu_custom_call.1']
    %8 = vsyncpa [#allocation3], 0
    // Predicated region
    $region2: #{tpu_custom_call.1} parent=1 // pred_check
      _
    $region3: #{tpu_custom_call.1} parent=1 // pred_check_branch
      %10 = sbr.rel (0) target = $region5
    $region4: #{tpu_custom_call.1} parent=1 // pred_region
      _
    $region5: #{tpu_custom_call.1} parent=1 // pred_fallthru
      _
    // Predicated region
    $region6: #{tpu_custom_call.1} parent=1 // pred_check
      _
    $region7: #{tpu_custom_call.1} parent=1 // pred_check_branch
      %12 = sbr.rel (0) target = $region9
    $region8: #{tpu_custom_call.1} parent=1 // pred_region
      _
    $region9: #{tpu_custom_call.1} parent=1 // pred_fallthru
      _
    // Predicated region
    $region10: #{tpu_custom_call.1} parent=1 // pred_check
      _
    $region11: #{tpu_custom_call.1} parent=1 // pred_check_branch
      %14 = sbr.rel (0) target = $region13
    $region12: #{tpu_custom_call.1} parent=1 // pred_region
      _
    $region13: #{tpu_custom_call.1} parent=1 // pred_fallthru
      _
    %v15 = vld [vmem:[%s0] sm:$0xff]
    %v16 = vld [vmem:[%s0 + $0x8] sm:$0xff]
    %v17 = vld [vmem:[%s1] sm:$0xff]
    %19 = vset.pattern.permute.xlu0 0
    %20 = vperm.xlu0 %19, %v17
    %v21 = vpop.permute.xlu0 %20
    %v23 = vmul.f32 %v15, %v21
    %v24 = vmul.f32 %v16, %v21
    %v25 = vld [vmem:[%s2] sm:$0xff]
    %27 = vset.pattern.permute.xlu0 0
    %28 = vperm.xlu0 %27, %v25
    %v29 = vpop.permute.xlu0 %28
    %v31 = vadd.f32 %v23, %v29
    %v32 = vadd.f32 %v24, %v29
    %33 = vst [vmem:[#allocation2] sm:$0xff] %v31
    %34 = vst [vmem:[#allocation2 + $0x8] sm:$0xff] %v32
    // Predicated region
    $region14: #{tpu_custom_call.1} parent=1 // pred_check
      _
    $region15: #{tpu_custom_call.1} parent=1 // pred_check_branch
      %36 = sbr.rel (0) target = $region17
    $region16: #{tpu_custom_call.1} parent=1 // pred_region
      %s38 = ssub.s32 256, 256
      %39 = vsyncadd [#allocation3], %s38
      %s41 = sshll.u32 [#allocation2], 4
      %s42 = int_to_ptr.vmem [resolvable:$true] %s41
      %44 = dma.vmem_to_hbm [thread:$0]  %s42, 256, %s3, [#allocation3]
    $region17: #{tpu_custom_call.1} parent=1 // pred_fallthru
      _
    // Predicated region
    $region18: #{tpu_custom_call.1} parent=1 // pred_check
      _
    $region19: #{tpu_custom_call.1} parent=1 // pred_check_branch
      %46 = sbr.rel (0) target = $region21
    $region20: #{tpu_custom_call.1} parent=1 // pred_region
      %47 = dma.done [#allocation3], 256
    $region21: #{tpu_custom_call.1} parent=1 // pred_fallthru
      _
    %48 = vsyncpa [#allocation3], 1

</llo_original>
